<compile_context>
chip_gen: v7x
topology: tpu7x:2x2x1
jax: 0.10.0
libtpu: 0.0.40
codegen_flags: <defaults>
</compile_context>

<pallas_src>
import jax
import jax.numpy as jnp
from jax.experimental import pallas as pl
from jax.experimental.pallas import tpu as pltpu


LANES = 512               # lane-dense last dim (multiple of 128)
MAX_TILE_ROWS = 2048      # (2048, 512) f32 tile = 4 MiB per operand
MIN_GRID_STEPS = 4        # enough steps to pipeline + shard across v7x's 2 TCs
_ROW_ALIGN = 8            # keep slab rows a multiple of the sublane count

# The roll-wraparound lane (p = LANES - 1) must be an odd lane so its weight
# is zero; guaranteed by LANES being even (and a multiple of 128 for layout).
assert LANES % 128 == 0 and LANES % 2 == 0


def _round_up(a, b):
    return (a + b - 1) // b * b


def dfbnet_kernel(wv0_ref, wv1_ref, x_ref, o_ref):
    """x_ref is the interleaved [c0, c1, c0, c1, ...] flat view of y.

    wv0[p] = w00 on even lanes, 0 on odd;  wv1[p] = w01 on even lanes, 0 on odd.
    out[even p] = w00 * x[p] + w01 * x[p + 1];  out[odd p] = 0.
    """
    x = x_ref[...]                                    # (TM, LANES) f32, VMEM
    # shifted[p] = x[(p + 1) % L]; the only wraparound lane (L - 1) is odd and
    # therefore multiplied by a zero weight below.  XLU slot -> off VALU path.
    x_next = pltpu.roll(x, x.shape[-1] - 1, 1)
    # 2 mul + 1 add per vreg; (1, LANES) weight rows broadcast over sublanes.
    o_ref[...] = wv0_ref[...] * x + wv1_ref[...] * x_next


@jax.jit
def dfbnet_forward(y, w):
    """Pallas wrapper.  y: (N, 2) float32, w: (2, 2) float32 (nn.Linear weight)."""
    N, F = y.shape
    assert F == 2 and w.shape == (2, 2)

    # Only row 0 of W matters: out[:, 0] = y @ W[0, :].  Premask it onto the
    # even lanes once in the wrapper (tiny XLA op) so the kernel loop carries
    # no iota / compare / select.
    lane_is_even = (jnp.arange(LANES) % 2) == 0
    w00 = w[0, 0].astype(jnp.float32)
    w01 = w[0, 1].astype(jnp.float32)
    wv0 = jnp.where(lane_is_even, w00, jnp.float32(0.0)).reshape(1, LANES)
    wv1 = jnp.where(lane_is_even, w01, jnp.float32(0.0)).reshape(1, LANES)

    # Row-major flat view: flat[2i] = y[i, 0], flat[2i + 1] = y[i, 1].
    flat = y.astype(jnp.float32).reshape(-1)          # (2N,)
    n_flat = 2 * N

    # Pad only to 8 * LANES (<= 16 KiB), NOT to tile_rows * LANES, so the
    # zero-copy fast path (no pad, no crop) triggers whenever N % 2048 == 0.
    n_padded = _round_up(n_flat, _ROW_ALIGN * LANES)
    padded = n_padded != n_flat
    if padded:
        flat = jnp.pad(flat, (0, n_padded - n_flat))
    total_rows = n_padded // LANES                    # multiple of 8
    x2d = flat.reshape(total_rows, LANES)

    # Split mid-sized inputs into >= MIN_GRID_STEPS blocks (partial last block
    # is fine: Pallas masks out-of-bounds output writes).
    tile_rows = min(
        MAX_TILE_ROWS,
        max(_ROW_ALIGN,
            _round_up(pl.cdiv(total_rows, MIN_GRID_STEPS), _ROW_ALIGN)))
    grid = (pl.cdiv(total_rows, tile_rows),)          # "parallel" -> 2-TC sharding

    out2d = pl.pallas_call(
        dfbnet_kernel,
        out_shape=jax.ShapeDtypeStruct((total_rows, LANES), jnp.float32),
        grid_spec=pltpu.PrefetchScalarGridSpec(
            num_scalar_prefetch=0,
            grid=grid,
            in_specs=[
                # Constant block index -> DMA'd once, not per step.
                pl.BlockSpec((1, LANES), lambda i: (0, 0)),
                pl.BlockSpec((1, LANES), lambda i: (0, 0)),
                pl.BlockSpec((tile_rows, LANES), lambda i: (i, 0)),
            ],
            out_specs=pl.BlockSpec((tile_rows, LANES), lambda i: (i, 0)),
        ),
        compiler_params=pltpu.CompilerParams(
            dimension_semantics=("parallel",),
            # 4 MiB tiles double-buffered in+out = 16 MiB; raise the scoped
            # VMEM limit explicitly so v5e's 16 MiB default does not reject it.
            vmem_limit_bytes=40 * 1024 * 1024,
            # Let XLA fuse the pad/reshape producer into the kernel's input
            # so the (rare) padded path avoids a full extra HBM pass.
            allow_input_fusion=[False, False, True],
        ),
        cost_estimate=pl.CostEstimate(
            flops=3 * n_padded,
            transcendentals=0,
            bytes_accessed=2 * n_padded * 4,          # f32 read + write
        ),
    )(wv0, wv1, x2d)

    # Zero-copy (pure bitcast reshape) when no padding fired; otherwise one
    # crop of the output slab back to the exact (N, 2) PyTorch layout.
    out_flat = out2d.reshape(-1)
    if padded:
        out_flat = out_flat[:n_flat]
    return out_flat.reshape(N, 2)


if __name__ == "__main__":
    # Deterministic parameter init, matching DFBNet.__init__:
    #   W = eye(2); W[0, 0] = 3
    W = jnp.eye(2, dtype=jnp.float32).at[0, 0].set(3.0)

    key = jax.random.PRNGKey(0)
    k1, k2, k3 = jax.random.split(key, 3)

    def reference(y, w):
        x = y @ w.T
        return jnp.zeros_like(x).at[:, 0].set(x[:, 0])

    cases = (
        ("small", 16, k1),      # tiny batch
        ("ragged", 1000, k2),   # exercises the pad / crop path
        ("aligned", 2048, k3),  # exercises the zero-copy fast path
    )
    for name, n, k in cases:
        y = jax.random.normal(k, (n, 2), dtype=jnp.float32)
        out = jax.block_until_ready(dfbnet_forward(y, W))
        ref = reference(y, W)
        assert out.shape == (n, 2), name
        assert jnp.allclose(out, ref, atol=1e-5), f"{name} mismatch"

    print("KERNEL_OK")
</pallas_src>

<mosaic_0001>
module attributes {stable_mosaic.version = 11 : i64} {
  func.func @dfbnet_kernel(%arg0: i32, %arg1: memref<1x512xf32, #tpu.memory_space<vmem>>, %arg2: memref<1x512xf32, #tpu.memory_space<vmem>>, %arg3: memref<8x512xf32, #tpu.memory_space<vmem>>, %arg4: memref<8x512xf32, #tpu.memory_space<vmem>>) attributes {dimension_semantics = [#tpu.dimension_semantics<parallel>], iteration_bounds = array<i64: 1>, scalar_prefetch = 0 : i64, scratch_operands = 0 : i64, tpu.core_type = #tpu.core_type<tc>, window_params = [{pipeline_mode = #tpu.pipeline_mode<synchronous>, transform_indices = @transform_0, window_bounds = array<i64: 1, 512>}, {pipeline_mode = #tpu.pipeline_mode<synchronous>, transform_indices = @transform_1, window_bounds = array<i64: 1, 512>}, {transform_indices = @transform_2, window_bounds = array<i64: 8, 512>}, {transform_indices = @transform_3, window_bounds = array<i64: 8, 512>}]} {
    %c0 = arith.constant 0 : index
    %c0_0 = arith.constant 0 : index
    %0 = vector.load %arg3[%c0, %c0_0] : memref<8x512xf32, #tpu.memory_space<vmem>>, vector<8x512xf32>
    %c511_i32 = arith.constant 511 : i32
    %1 = tpu.dynamic_rotate %0 by %c511_i32 dim 1 : vector<8x512xf32>, i32 -> vector<8x512xf32>
    %c0_1 = arith.constant 0 : index
    %c0_2 = arith.constant 0 : index
    %2 = vector.load %arg1[%c0_1, %c0_2] : memref<1x512xf32, #tpu.memory_space<vmem>>, vector<1x512xf32>
    %3 = vector.broadcast %2 : vector<1x512xf32> to vector<8x512xf32>
    %4 = arith.mulf %3, %0 : vector<8x512xf32>
    %c0_3 = arith.constant 0 : index
    %c0_4 = arith.constant 0 : index
    %5 = vector.load %arg2[%c0_3, %c0_4] : memref<1x512xf32, #tpu.memory_space<vmem>>, vector<1x512xf32>
    %6 = vector.broadcast %5 : vector<1x512xf32> to vector<8x512xf32>
    %7 = arith.mulf %6, %1 : vector<8x512xf32>
    %8 = arith.addf %4, %7 : vector<8x512xf32>
    %c0_5 = arith.constant 0 : index
    %c0_6 = arith.constant 0 : index
    %9 = vector.load %arg4[%c0_5, %c0_6] : memref<8x512xf32, #tpu.memory_space<vmem>>, vector<8x512xf32>
    tpu.vector_store %arg4[%c0_5, %c0_6], %8 {strides = array<i32>} : memref<8x512xf32, #tpu.memory_space<vmem>>, vector<8x512xf32>,
    return
  }
  func.func @transform_0(%arg0: i32) -> (i32, i32) {
    %c0_i32 = arith.constant 0 : i32
    %c0_i32_0 = arith.constant 0 : i32
    %c0_i32_1 = arith.constant 0 : i32
    return %c0_i32, %c0_i32_0 : i32, i32
  }
  func.func @transform_1(%arg0: i32) -> (i32, i32) {
    %c0_i32 = arith.constant 0 : i32
    %c0_i32_0 = arith.constant 0 : i32
    %c0_i32_1 = arith.constant 0 : i32
    return %c0_i32, %c0_i32_0 : i32, i32
  }
  func.func @transform_2(%arg0: i32) -> (i32, i32) {
    %c0_i32 = arith.constant 0 : i32
    %c0_i32_0 = arith.constant 0 : i32
    return %arg0, %c0_i32 : i32, i32
  }
  func.func @transform_3(%arg0: i32) -> (i32, i32) {
    %c0_i32 = arith.constant 0 : i32
    %c0_i32_0 = arith.constant 0 : i32
    return %arg0, %c0_i32 : i32, i32
  }
}

</mosaic_0001>

<llo_original>
// kernel: dfbnet_forward.1
$region0: #{dfbnet_forward.1}
  #allocation0 [shape = 'u32[]', space=smem, size = 0x4, offset = 0x4, fixed_abs, tag = 'smem constant byte address 0x4 - core index']
  #allocation1 [shape = 'u32[144,128]{1,0:T(1,128)}', space=vmem, size = 0x12000, scoped, tag = 'internal scratch']
  %s0 = inlined_call_operand.vmem [shape: f32[1,512], index: 0, kind: input, shape index: {}]
  %s1 = inlined_call_operand.vmem [shape: f32[1,512], index: 1, kind: input, shape index: {}]
  %s2 = inlined_call_operand.vmem [shape: f32[8,512], index: 2, kind: input, shape index: {}]
  %s3 = inlined_call_operand.vmem [shape: f32[8,512], index: 3, kind: output, shape index: {}]
  %s4 = sld [smem:[#allocation0]]
  $region22: #{dfbnet_forward.1} parent=0
    _
  %s6 = ssub.s32 1, %s4
  %s7 = scalar_select 0, %s6, %s4
  // Predicated region
  $region2: #{dfbnet_forward.1} parent=0 // pred_check
    _
  $region3: #{dfbnet_forward.1} parent=0 // pred_check_branch
    %9 = sbr.rel (0) target = $region5
  $region4: #{dfbnet_forward.1} parent=0 // pred_region
    _
  $region5: #{dfbnet_forward.1} parent=0 // pred_fallthru
    _
  // Predicated region
  $region6: #{dfbnet_forward.1} parent=0 // pred_check
    _
  $region7: #{dfbnet_forward.1} parent=0 // pred_check_branch
    %11 = sbr.rel (0) target = $region9
  $region8: #{dfbnet_forward.1} parent=0 // pred_region
    _
  $region9: #{dfbnet_forward.1} parent=0 // pred_fallthru
    _
  // Predicated region
  $region10: #{dfbnet_forward.1} parent=0 // pred_check
    _
  $region11: #{dfbnet_forward.1} parent=0 // pred_check_branch
    %13 = sbr.rel (0) target = $region13
  $region12: #{dfbnet_forward.1} parent=0 // pred_region
    _
  $region13: #{dfbnet_forward.1} parent=0 // pred_fallthru
    _
  %v14 = vld [vmem:[%s2] sm:$0xff]
  %v15 = vld [vmem:[%s2 + $0x8] sm:$0xff]
  %v16 = vld [vmem:[%s2 + $0x10] sm:$0xff]
  %v17 = vld [vmem:[%s2 + $0x18] sm:$0xff]
  %18 = vrot.lane.b32.xlu0 %v14, 127
  %v19 = vpop.permute.xlu0 %18
  %20 = vrot.lane.b32.xlu0 %v15, 127
  %v21 = vpop.permute.xlu0 %20
  %22 = vrot.lane.b32.xlu0 %v16, 127
  %v23 = vpop.permute.xlu0 %22
  %24 = vrot.lane.b32.xlu0 %v17, 127
  %v25 = vpop.permute.xlu0 %24
  %v26 = vlaneseq
  %v27 = vand.u32 %v26, 127
  %vm28 = vcmp.lt.s32.totalorder %v27, 127
  %v29 = vsel %vm28, %v23, %v25
  %v30 = vsel %vm28, %v21, %v23
  %v31 = vsel %vm28, %v19, %v21
  %v32 = vsel %vm28, %v25, %v19
  %v33 = vld [vmem:[%s0] sm:$0xf]
  %v35 = vlaneseq
  %v36 = vshrl.u32 %v35, 7
  %v37 = vsub.s32 0, %v36
  %v38 = vrot.slane %v33, %v37
  %v39 = vlaneseq
  %v40 = vshrl.u32 %v39, 7
  %v41 = vsub.s32 1, %v40
  %v42 = vrot.slane %v33, %v41
  %v43 = vlaneseq
  %v44 = vshrl.u32 %v43, 7
  %v45 = vsub.s32 2, %v44
  %v46 = vrot.slane %v33, %v45
  %v47 = vlaneseq
  %v48 = vshrl.u32 %v47, 7
  %v49 = vsub.s32 3, %v48
  %v50 = vrot.slane %v33, %v49
  %v55 = vmul.f32 %v38, %v14
  %v56 = vmul.f32 %v42, %v15
  %v57 = vmul.f32 %v46, %v16
  %v58 = vmul.f32 %v50, %v17
  %v59 = vld [vmem:[%s1] sm:$0xf]
  %v61 = vlaneseq
  %v62 = vshrl.u32 %v61, 7
  %v63 = vsub.s32 0, %v62
  %v64 = vrot.slane %v59, %v63
  %v65 = vlaneseq
  %v66 = vshrl.u32 %v65, 7
  %v67 = vsub.s32 1, %v66
  %v68 = vrot.slane %v59, %v67
  %v69 = vlaneseq
  %v70 = vshrl.u32 %v69, 7
  %v71 = vsub.s32 2, %v70
  %v72 = vrot.slane %v59, %v71
  %v73 = vlaneseq
  %v74 = vshrl.u32 %v73, 7
  %v75 = vsub.s32 3, %v74
  %v76 = vrot.slane %v59, %v75
  %v81 = vmul.f32 %v64, %v31
  %v82 = vmul.f32 %v68, %v30
  %v83 = vmul.f32 %v72, %v29
  %v84 = vmul.f32 %v76, %v32
  %v85 = vadd.f32 %v55, %v81
  %v86 = vadd.f32 %v56, %v82
  %v87 = vadd.f32 %v57, %v83
  %v88 = vadd.f32 %v58, %v84
  %89 = vst [vmem:[%s3] sm:$0xff] %v85
  %90 = vst [vmem:[%s3 + $0x8] sm:$0xff] %v86
  %91 = vst [vmem:[%s3 + $0x10] sm:$0xff] %v87
  %92 = vst [vmem:[%s3 + $0x18] sm:$0xff] %v88
  // Predicated region
  $region14: #{dfbnet_forward.1} parent=0 // pred_check
    _
  $region15: #{dfbnet_forward.1} parent=0 // pred_check_branch
    %94 = sbr.rel (0) target = $region17
  $region16: #{dfbnet_forward.1} parent=0 // pred_region
    _
  $region17: #{dfbnet_forward.1} parent=0 // pred_fallthru
    _
  // Predicated region
  $region18: #{dfbnet_forward.1} parent=0 // pred_check
    _
  $region19: #{dfbnet_forward.1} parent=0 // pred_check_branch
    %96 = sbr.rel (0) target = $region21
  $region20: #{dfbnet_forward.1} parent=0 // pred_region
    _
  $region21: #{dfbnet_forward.1} parent=0 // pred_fallthru
    _

</llo_original>
